<compile_context>
chip_gen: v5e
topology: v5e:2x2
jax: 0.10.0
libtpu: 0.0.40
codegen_flags: <defaults>
</compile_context>

<pallas_src>
import jax
import jax.numpy as jnp
import numpy as np
from jax.experimental import pallas as pl
from jax.experimental.pallas import tpu as pltpu

RANK_VOCAB, RANK_DIM = 13, 8
SUIT_VOCAB, SUIT_DIM = 4, 4
OUT_DIM = RANK_DIM + SUIT_DIM          # 12
VOCAB_PAD = 24                         # 13 + 4 = 17, padded to a sublane multiple
LANE = 128                             # full-lane output width


def _round_up(x, m):
    return ((x + m - 1) // m) * m


def _build_fused_table(rank_table, suit_table):
    """Block-diagonal (VOCAB_PAD, LANE) table: one matmul serves both lookups."""
    t = jnp.zeros((VOCAB_PAD, LANE), jnp.float32)
    t = t.at[0:RANK_VOCAB, 0:RANK_DIM].set(rank_table.astype(jnp.float32))
    t = t.at[RANK_VOCAB:RANK_VOCAB + SUIT_VOCAB,
             RANK_DIM:OUT_DIM].set(suit_table.astype(jnp.float32))
    return t


def _card_embed_kernel(cards_ref, table_ref, out_ref):
    cards = cards_ref[...]                                   # (TB, N) int32
    tb, n = cards.shape

    # suit = card // 13 via comparisons (no vector integer division);
    # rank = card - 13 * suit == card % 13.
    suits = ((cards >= 13).astype(jnp.int32)
             + (cards >= 26).astype(jnp.int32)
             + (cards >= 39).astype(jnp.int32))              # (TB, N)
    ranks = cards - 13 * suits                               # (TB, N)
    fused_suits = suits + RANK_VOCAB                         # 13..16

    # Per-hand fused histogram over the 24-entry (padded) vocab.  Each card
    # hits exactly one rank slot (0..12) and one suit slot (13..16).
    iota = jax.lax.broadcasted_iota(jnp.int32, (tb, n, VOCAB_PAD), 2)
    hit = (ranks[:, :, None] == iota) | (fused_suits[:, :, None] == iota)
    counts = hit.astype(jnp.float32).sum(axis=1)             # (TB, 24)

    # PyTorch error path: any card outside [0, 51] -> zeros for that hand.
    # Fold the mean 1/N and the validity gate into one per-hand scale applied
    # to the narrow counts tensor (24 lanes), so the MXU output is stored
    # directly with no 128-lane post-processing.
    valid = jnp.min(((cards >= 0) & (cards <= 51)).astype(jnp.float32),
                    axis=1, keepdims=True)                   # (TB, 1)
    counts = counts * (valid * (1.0 / n))                    # (TB, 24)

    # One matmul against the fused block-diagonal table yields both means.
    out_ref[...] = jnp.dot(counts, table_ref[...],
                           preferred_element_type=jnp.float32)   # (TB, 128)


def card_embedding_batched(cards, rank_table, suit_table, *, block_b=128):
    """cards: (B, N) int32 with values in [0, 51].  Returns (B, 12) f32."""
    cards = jnp.asarray(cards, jnp.int32)
    B, N = int(cards.shape[0]), int(cards.shape[1])
    if B == 0 or N == 0:
        return jnp.zeros((B, OUT_DIM), jnp.float32)

    table = _build_fused_table(rank_table, suit_table)

    tb = block_b if B > block_b else _round_up(B, 8)
    bp = _round_up(B, tb)
    cards_p = cards if bp == B else jnp.pad(cards, ((0, bp - B), (0, 0)))

    out_shape = jax.ShapeDtypeStruct((bp, LANE), jnp.float32)
    if bp == tb:
        # Single tile: skip the degenerate 1-point grid entirely.
        out = pl.pallas_call(
            _card_embed_kernel,
            out_shape=out_shape,
            in_specs=[pl.BlockSpec((tb, N), lambda: (0, 0)),
                      pl.BlockSpec((VOCAB_PAD, LANE), lambda: (0, 0))],
            out_specs=pl.BlockSpec((tb, LANE), lambda: (0, 0)),
        )(cards_p, table)
    else:
        out = pl.pallas_call(
            _card_embed_kernel,
            out_shape=out_shape,
            grid=(bp // tb,),
            in_specs=[pl.BlockSpec((tb, N), lambda i: (i, 0)),
                      # Fused table stays resident across the whole grid.
                      pl.BlockSpec((VOCAB_PAD, LANE), lambda i: (0, 0))],
            out_specs=pl.BlockSpec((tb, LANE), lambda i: (i, 0)),
            compiler_params=pltpu.CompilerParams(
                dimension_semantics=("parallel",)),
        )(cards_p, table)

    return out[:B, :OUT_DIM]


def card_embedding(cards, rank_table, suit_table):
    """Single hand (original module forward): cards (N,) int32 -> (12,) f32."""
    cards = jnp.asarray(cards, jnp.int32)
    n = int(cards.shape[0])
    if n == 0:
        return jnp.zeros((OUT_DIM,), jnp.float32)
    return card_embedding_batched(cards.reshape(1, n), rank_table, suit_table)[0]


if __name__ == "__main__":
    key = jax.random.PRNGKey(0)
    k_rank, k_suit, k_hand, k_batch = jax.random.split(key, 4)

    # nn.Embedding default init: N(0, 1).
    rank_table = jax.random.normal(k_rank, (RANK_VOCAB, RANK_DIM), jnp.float32)
    suit_table = jax.random.normal(k_suit, (SUIT_VOCAB, SUIT_DIM), jnp.float32)

    def reference(cards_bn):
        r = cards_bn % 13
        s = cards_bn // 13
        return jnp.concatenate([rank_table[r].mean(axis=1),
                                suit_table[s].mean(axis=1)], axis=1)

    # --- single hand (original module semantics, gridless single-tile path) ---
    hand = jax.random.randint(k_hand, (5,), 0, 52, dtype=jnp.int32)
    out1 = jax.block_until_ready(card_embedding(hand, rank_table, suit_table))
    ref1 = reference(hand.reshape(1, 5))[0]
    np.testing.assert_allclose(np.asarray(out1), np.asarray(ref1),
                               rtol=1e-5, atol=1e-5)

    # --- batched hands (gridded path, resident table, "parallel" hands axis) --
    batch = jax.random.randint(k_batch, (256, 7), 0, 52, dtype=jnp.int32)
    out2 = jax.block_until_ready(
        card_embedding_batched(batch, rank_table, suit_table))
    ref2 = reference(batch)
    np.testing.assert_allclose(np.asarray(out2), np.asarray(ref2),
                               rtol=1e-5, atol=1e-5)

    # --- PyTorch error paths: empty hand / invalid card -> zeros(12) ----------
    empty = card_embedding(jnp.zeros((0,), jnp.int32), rank_table, suit_table)
    np.testing.assert_allclose(np.asarray(empty), np.zeros(OUT_DIM))
    bad = jax.block_until_ready(
        card_embedding(jnp.array([3, 77], jnp.int32), rank_table, suit_table))
    np.testing.assert_allclose(np.asarray(bad), np.zeros(OUT_DIM))

    print("KERNEL_OK")
</pallas_src>

<mosaic_0001>
module attributes {stable_mosaic.version = 11 : i64} {
  func.func @_card_embed_kernel(%arg0: memref<8x5xi32, #tpu.memory_space<vmem>>, %arg1: memref<24x128xf32, #tpu.memory_space<vmem>>, %arg2: memref<8x128xf32, #tpu.memory_space<vmem>>) attributes {dimension_semantics = [], scalar_prefetch = 0 : i64, scratch_operands = 0 : i64, tpu.core_type = #tpu.core_type<tc>} {
    %c0 = arith.constant 0 : index
    %c0_0 = arith.constant 0 : index
    %0 = vector.load %arg0[%c0, %c0_0] : memref<8x5xi32, #tpu.memory_space<vmem>>, vector<8x5xi32>
    %c13_i32 = arith.constant 13 : i32
    %1 = vector.broadcast %c13_i32 : i32 to vector<8x5xi32>
    %2 = arith.cmpi sge, %0, %1 : vector<8x5xi32>
    %3 = arith.extui %2 : vector<8x5xi1> to vector<8x5xi32>
    %c26_i32 = arith.constant 26 : i32
    %4 = vector.broadcast %c26_i32 : i32 to vector<8x5xi32>
    %5 = arith.cmpi sge, %0, %4 : vector<8x5xi32>
    %6 = arith.extui %5 : vector<8x5xi1> to vector<8x5xi32>
    %7 = arith.addi %3, %6 : vector<8x5xi32>
    %c39_i32 = arith.constant 39 : i32
    %8 = vector.broadcast %c39_i32 : i32 to vector<8x5xi32>
    %9 = arith.cmpi sge, %0, %8 : vector<8x5xi32>
    %10 = arith.extui %9 : vector<8x5xi1> to vector<8x5xi32>
    %11 = arith.addi %7, %10 : vector<8x5xi32>
    %c13_i32_1 = arith.constant 13 : i32
    %12 = vector.broadcast %c13_i32_1 : i32 to vector<8x5xi32>
    %13 = arith.muli %12, %11 : vector<8x5xi32>
    %14 = arith.subi %0, %13 : vector<8x5xi32>
    %c13_i32_2 = arith.constant 13 : i32
    %15 = vector.broadcast %c13_i32_2 : i32 to vector<8x5xi32>
    %16 = arith.addi %11, %15 : vector<8x5xi32>
    %17 = tpu.iota {dimensions = array<i32: 2>} : vector<8x5x24xi32>
    %18 = vector.shape_cast %14 : vector<8x5xi32> to vector<8x5x1xi32>
    %19 = vector.broadcast %18 : vector<8x5x1xi32> to vector<8x5x24xi32>
    %20 = arith.cmpi eq, %19, %17 : vector<8x5x24xi32>
    %21 = vector.shape_cast %16 : vector<8x5xi32> to vector<8x5x1xi32>
    %22 = vector.broadcast %21 : vector<8x5x1xi32> to vector<8x5x24xi32>
    %23 = arith.cmpi eq, %22, %17 : vector<8x5x24xi32>
    %24 = arith.ori %20, %23 : vector<8x5x24xi1>
    %25 = arith.extui %24 : vector<8x5x24xi1> to vector<8x5x24xi32>
    %26 = arith.sitofp %25 : vector<8x5x24xi32> to vector<8x5x24xf32>
    %cst = arith.constant dense<0.000000e+00> : vector<8x24xf32>
    %27 = vector.multi_reduction <add>, %26, %cst [1] : vector<8x5x24xf32> to vector<8x24xf32>
    %c0_i32 = arith.constant 0 : i32
    %28 = vector.broadcast %c0_i32 : i32 to vector<8x5xi32>
    %29 = arith.cmpi sge, %0, %28 : vector<8x5xi32>
    %c51_i32 = arith.constant 51 : i32
    %30 = vector.broadcast %c51_i32 : i32 to vector<8x5xi32>
    %31 = arith.cmpi sle, %0, %30 : vector<8x5xi32>
    %32 = arith.andi %29, %31 : vector<8x5xi1>
    %33 = arith.extui %32 : vector<8x5xi1> to vector<8x5xi32>
    %34 = arith.sitofp %33 : vector<8x5xi32> to vector<8x5xf32>
    %cst_3 = arith.constant dense<0x7F800000> : vector<8xf32>
    %35 = vector.multi_reduction <minimumf>, %34, %cst_3 [1] : vector<8x5xf32> to vector<8xf32>
    %36 = vector.shape_cast %35 : vector<8xf32> to vector<8x1xf32>
    %cst_4 = arith.constant 2.000000e-01 : f32
    %37 = vector.broadcast %cst_4 : f32 to vector<8x1xf32>
    %38 = arith.mulf %36, %37 : vector<8x1xf32>
    %39 = vector.broadcast %38 : vector<8x1xf32> to vector<8x24xf32>
    %40 = arith.mulf %27, %39 : vector<8x24xf32>
    %c0_5 = arith.constant 0 : index
    %c0_6 = arith.constant 0 : index
    %41 = vector.load %arg1[%c0_5, %c0_6] : memref<24x128xf32, #tpu.memory_space<vmem>>, vector<24x128xf32>
    %cst_7 = arith.constant dense<0.000000e+00> : vector<8x128xf32>
    %42 = tpu.matmul %40, %41, %cst_7 {dimension_numbers = #tpu.dot_dimension_numbers<[1], [0], [0], [1], [0, 0, 1, 1], [], []>} : vector<8x24xf32>, vector<24x128xf32>, vector<8x128xf32> -> vector<8x128xf32>
    %c0_8 = arith.constant 0 : index
    %c0_9 = arith.constant 0 : index
    %43 = vector.load %arg2[%c0_8, %c0_9] : memref<8x128xf32, #tpu.memory_space<vmem>>, vector<8x128xf32>
    tpu.vector_store %arg2[%c0_8, %c0_9], %42 {strides = array<i32>} : memref<8x128xf32, #tpu.memory_space<vmem>>, vector<8x128xf32>,
    return
  }
}

</mosaic_0001>

<llo_original>
// kernel: tpu_custom_call.1
$region0: #{tpu_custom_call.1}
  #allocation0 [shape = 'u32[]', space=smem, size = 0x4, offset = 0x4, fixed_abs, tag = 'smem constant byte address 0x4 - core index']
  #allocation1 [shape = 'u32[72,128]{1,0:T(1,128)}', space=vmem, size = 0x9000, scoped, tag = 'internal scratch']
  %s0 = inlined_call_operand.hbm [shape: s32[8,5], index: 0, kind: input, shape index: {}]
  %s1 = inlined_call_operand.hbm [shape: f32[24,128], index: 1, kind: input, shape index: {}]
  %s2 = inlined_call_operand.hbm [shape: f32[8,128], index: 2, kind: output, shape index: {}]
  %s3 = sld [smem:[#allocation0]]
  $region26: #{tpu_custom_call.1} parent=0
    _
  %s5 = ssub.s32 1, %s3
  %s6 = scalar_select 0, %s5, %s3
  $region1: #{tpu_custom_call.1} parent=0
    #allocation2 [shape = 'u8[4096]{0}', space=vmem, size = 0x1000, scoped, tag = 'input window, operand 0, single buffered']
    #allocation3 [shape = 's32[1]{0}', space=sflag, size = 0x4, scoped, tag = 'scoped memory for tpu_custom_call.1']
    #allocation4 [shape = 's32[1]{0}', space=sflag, size = 0x4, scoped, tag = 'scoped memory for tpu_custom_call.1']
    #allocation5 [shape = 'u8[12288]{0}', space=vmem, size = 0x3000, scoped, tag = 'input window, operand 1, single buffered']
    #allocation6 [shape = 's32[1]{0}', space=sflag, size = 0x4, scoped, tag = 'scoped memory for tpu_custom_call.1']
    #allocation7 [shape = 'u8[4096]{0}', space=vmem, size = 0x1000, scoped, tag = 'output window, operand 0, single buffered']
    %7 = vsyncpa [#allocation3], 0
    %8 = vsyncpa [#allocation6], 0
    %9 = vsyncpa [#allocation4], 0
    // Predicated region
    $region2: #{tpu_custom_call.1} parent=1 // pred_check
      _
    $region3: #{tpu_custom_call.1} parent=1 // pred_check_branch
      %11 = sbr.rel (0) target = $region5
    $region4: #{tpu_custom_call.1} parent=1 // pred_region
      %13 = vsyncadd [#allocation3], 0
      %s15 = sshll.u32 %s0, 4
      %s16 = int_to_ptr.hbm [resolvable:$true] %s15
      %s17 = sshll.u32 [#allocation2], 4
      %s18 = int_to_ptr.vmem [resolvable:$true] %s17
      %20 = dma.hbm_to_vmem [thread:$0]  %s16, 128, %s18, [#allocation3]
    $region5: #{tpu_custom_call.1} parent=1 // pred_fallthru
      _
    // Predicated region
    $region6: #{tpu_custom_call.1} parent=1 // pred_check
      _
    $region7: #{tpu_custom_call.1} parent=1 // pred_check_branch
      %22 = sbr.rel (0) target = $region9
    $region8: #{tpu_custom_call.1} parent=1 // pred_region
      %24 = vsyncadd [#allocation6], 0
      %s25 = sshll.u32 %s1, 4
      %s26 = int_to_ptr.hbm [resolvable:$true] %s25
      %s27 = sshll.u32 [#allocation5], 4
      %s28 = int_to_ptr.vmem [resolvable:$true] %s27
      %33 = dma.hbm_to_vmem [thread:$0]  %s26, 384, %s28, [#allocation6], 128, 128, 8
    $region9: #{tpu_custom_call.1} parent=1 // pred_fallthru
      _
    // Predicated region
    $region10: #{tpu_custom_call.1} parent=1 // pred_check
      _
    $region11: #{tpu_custom_call.1} parent=1 // pred_check_branch
      %35 = sbr.rel (0) target = $region13
    $region12: #{tpu_custom_call.1} parent=1 // pred_region
      %37 = dma.done [#allocation3], 128
    $region13: #{tpu_custom_call.1} parent=1 // pred_fallthru
      _
    // Predicated region
    $region14: #{tpu_custom_call.1} parent=1 // pred_check
      _
    $region15: #{tpu_custom_call.1} parent=1 // pred_check_branch
      %39 = sbr.rel (0) target = $region17
    $region16: #{tpu_custom_call.1} parent=1 // pred_region
      %41 = dma.done [#allocation6], 384
    $region17: #{tpu_custom_call.1} parent=1 // pred_fallthru
      _
    %v42 = vld [vmem:[#allocation2] sm:$0xff]
    %vm43 = vcmp.ge.s32.totalorder %v42, 13
    %v44 = vsel %vm43, 1, 0
    %vm45 = vcmp.ge.s32.totalorder %v42, 26
    %v46 = vsel %vm45, 1, 0
    %v47 = vadd.s32 %v44, %v46
    %vm48 = vcmp.ge.s32.totalorder %v42, 39
    %v49 = vsel %vm48, 1, 0
    %v50 = vadd.s32 %v47, %v49
    %v51 = vmul.u32 %v50, 13
    %v52 = vsub.s32 %v42, %v51
    %v53 = vadd.s32 %v50, 13
    %v54 = vlaneseq
    %v55 = vand.u32 %v54, 127
    %v56 = vperm.slane %v52, 0
    %v57 = vlaneseq
    %v58 = vshrl.u32 %v57, 7
    %60 = vset.pattern.permute.xlu0 %v58
    %61 = vperm.xlu0 %60, %v56
    %v62 = vpop.permute.xlu0 %61
    %v63 = vperm.slane %v52, 1
    %v64 = vlaneseq
    %v65 = vshrl.u32 %v64, 7
    %67 = vset.pattern.permute.xlu0 %v65
    %68 = vperm.xlu0 %67, %v63
    %v69 = vpop.permute.xlu0 %68
    %v70 = vperm.slane %v52, 2
    %v71 = vlaneseq
    %v72 = vshrl.u32 %v71, 7
    %74 = vset.pattern.permute.xlu0 %v72
    %75 = vperm.xlu0 %74, %v70
    %v76 = vpop.permute.xlu0 %75
    %v77 = vperm.slane %v52, 3
    %v78 = vlaneseq
    %v79 = vshrl.u32 %v78, 7
    %81 = vset.pattern.permute.xlu0 %v79
    %82 = vperm.xlu0 %81, %v77
    %v83 = vpop.permute.xlu0 %82
    %v84 = vperm.slane %v52, 4
    %v85 = vlaneseq
    %v86 = vshrl.u32 %v85, 7
    %88 = vset.pattern.permute.xlu0 %v86
    %89 = vperm.xlu0 %88, %v84
    %v90 = vpop.permute.xlu0 %89
    %v91 = vperm.slane %v52, 5
    %v92 = vlaneseq
    %v93 = vshrl.u32 %v92, 7
    %95 = vset.pattern.permute.xlu0 %v93
    %96 = vperm.xlu0 %95, %v91
    %v97 = vpop.permute.xlu0 %96
    %v98 = vperm.slane %v52, 6
    %v99 = vlaneseq
    %v100 = vshrl.u32 %v99, 7
    %102 = vset.pattern.permute.xlu0 %v100
    %103 = vperm.xlu0 %102, %v98
    %v104 = vpop.permute.xlu0 %103
    %v105 = vperm.slane %v52, 7
    %v106 = vlaneseq
    %v107 = vshrl.u32 %v106, 7
    %109 = vset.pattern.permute.xlu0 %v107
    %110 = vperm.xlu0 %109, %v105
    %v111 = vpop.permute.xlu0 %110
    %vm112 = vcmp.eq.s32.totalorder %v62, %v55
    %vm113 = vcmp.eq.s32.totalorder %v69, %v55
    %vm114 = vcmp.eq.s32.totalorder %v76, %v55
    %vm115 = vcmp.eq.s32.totalorder %v83, %v55
    %vm116 = vcmp.eq.s32.totalorder %v90, %v55
    %vm117 = vcmp.eq.s32.totalorder %v97, %v55
    %vm118 = vcmp.eq.s32.totalorder %v104, %v55
    %vm119 = vcmp.eq.s32.totalorder %v111, %v55
    %v120 = vperm.slane %v53, 0
    %v121 = vlaneseq
    %v122 = vshrl.u32 %v121, 7
    %124 = vset.pattern.permute.xlu0 %v122
    %125 = vperm.xlu0 %124, %v120
    %v126 = vpop.permute.xlu0 %125
    %v127 = vperm.slane %v53, 1
    %v128 = vlaneseq
    %v129 = vshrl.u32 %v128, 7
    %131 = vset.pattern.permute.xlu0 %v129
    %132 = vperm.xlu0 %131, %v127
    %v133 = vpop.permute.xlu0 %132
    %v134 = vperm.slane %v53, 2
    %v135 = vlaneseq
    %v136 = vshrl.u32 %v135, 7
    %138 = vset.pattern.permute.xlu0 %v136
    %139 = vperm.xlu0 %138, %v134
    %v140 = vpop.permute.xlu0 %139
    %v141 = vperm.slane %v53, 3
    %v142 = vlaneseq
    %v143 = vshrl.u32 %v142, 7
    %145 = vset.pattern.permute.xlu0 %v143
    %146 = vperm.xlu0 %145, %v141
    %v147 = vpop.permute.xlu0 %146
    %v148 = vperm.slane %v53, 4
    %v149 = vlaneseq
    %v150 = vshrl.u32 %v149, 7
    %152 = vset.pattern.permute.xlu0 %v150
    %153 = vperm.xlu0 %152, %v148
    %v154 = vpop.permute.xlu0 %153
    %v155 = vperm.slane %v53, 5
    %v156 = vlaneseq
    %v157 = vshrl.u32 %v156, 7
    %159 = vset.pattern.permute.xlu0 %v157
    %160 = vperm.xlu0 %159, %v155
    %v161 = vpop.permute.xlu0 %160
    %v162 = vperm.slane %v53, 6
    %v163 = vlaneseq
    %v164 = vshrl.u32 %v163, 7
    %166 = vset.pattern.permute.xlu0 %v164
    %167 = vperm.xlu0 %166, %v162
    %v168 = vpop.permute.xlu0 %167
    %v169 = vperm.slane %v53, 7
    %v170 = vlaneseq
    %v171 = vshrl.u32 %v170, 7
    %173 = vset.pattern.permute.xlu0 %v171
    %174 = vperm.xlu0 %173, %v169
    %v175 = vpop.permute.xlu0 %174
    %vm176 = vcmp.eq.s32.totalorder %v126, %v55
    %vm177 = vcmp.eq.s32.totalorder %v133, %v55
    %vm178 = vcmp.eq.s32.totalorder %v140, %v55
    %vm179 = vcmp.eq.s32.totalorder %v147, %v55
    %vm180 = vcmp.eq.s32.totalorder %v154, %v55
    %vm181 = vcmp.eq.s32.totalorder %v161, %v55
    %vm182 = vcmp.eq.s32.totalorder %v168, %v55
    %vm183 = vcmp.eq.s32.totalorder %v175, %v55
    %vm184 = vmor %vm112, %vm176
    %vm185 = vmor %vm113, %vm177
    %vm186 = vmor %vm114, %vm178
    %vm187 = vmor %vm115, %vm179
    %vm188 = vmor %vm116, %vm180
    %vm189 = vmor %vm117, %vm181
    %vm190 = vmor %vm118, %vm182
    %vm191 = vmor %vm119, %vm183
    %v192 = vsel %vm184, 1, 0
    %v193 = vsel %vm185, 1, 0
    %v194 = vsel %vm186, 1, 0
    %v195 = vsel %vm187, 1, 0
    %v196 = vsel %vm188, 1, 0
    %v197 = vsel %vm189, 1, 0
    %v198 = vsel %vm190, 1, 0
    %v199 = vsel %vm191, 1, 0
    %v200 = vcvt.s32.f32 %v192
    %v201 = vcvt.s32.f32 %v193
    %v202 = vcvt.s32.f32 %v194
    %v203 = vcvt.s32.f32 %v195
    %v204 = vcvt.s32.f32 %v196
    %v205 = vcvt.s32.f32 %v197
    %v206 = vcvt.s32.f32 %v198
    %v207 = vcvt.s32.f32 %v199
    %vm208 = vcmask 192512
    %v209 = vsel %vm208, %v200, 0.0
    %v210 = vrot.slane %v209, 4
    %v211 = vadd.f32 %v209, %v210
    %v212 = vrot.slane %v211, 2
    %v213 = vadd.f32 %v211, %v212
    %v214 = vrot.slane %v213, 1
    %v215 = vadd.f32 %v213, %v214
    %v216 = vsel %vm208, %v201, 0.0
    %v217 = vrot.slane %v216, 4
    %v218 = vadd.f32 %v216, %v217
    %v219 = vrot.slane %v218, 2
    %v220 = vadd.f32 %v218, %v219
    %v221 = vrot.slane %v220, 1
    %v222 = vadd.f32 %v220, %v221
    %v223 = vsel %vm208, %v202, 0.0
    %v224 = vrot.slane %v223, 4
    %v225 = vadd.f32 %v223, %v224
    %v226 = vrot.slane %v225, 2
    %v227 = vadd.f32 %v225, %v226
    %v228 = vrot.slane %v227, 1
    %v229 = vadd.f32 %v227, %v228
    %v230 = vsel %vm208, %v203, 0.0
    %v231 = vrot.slane %v230, 4
    %v232 = vadd.f32 %v230, %v231
    %v233 = vrot.slane %v232, 2
    %v234 = vadd.f32 %v232, %v233
    %v235 = vrot.slane %v234, 1
    %v236 = vadd.f32 %v234, %v235
    %v237 = vsel %vm208, %v204, 0.0
    %v238 = vrot.slane %v237, 4
    %v239 = vadd.f32 %v237, %v238
    %v240 = vrot.slane %v239, 2
    %v241 = vadd.f32 %v239, %v240
    %v242 = vrot.slane %v241, 1
    %v243 = vadd.f32 %v241, %v242
    %v244 = vsel %vm208, %v205, 0.0
    %v245 = vrot.slane %v244, 4
    %v246 = vadd.f32 %v244, %v245
    %v247 = vrot.slane %v246, 2
    %v248 = vadd.f32 %v246, %v247
    %v249 = vrot.slane %v248, 1
    %v250 = vadd.f32 %v248, %v249
    %v251 = vsel %vm208, %v206, 0.0
    %v252 = vrot.slane %v251, 4
    %v253 = vadd.f32 %v251, %v252
    %v254 = vrot.slane %v253, 2
    %v255 = vadd.f32 %v253, %v254
    %v256 = vrot.slane %v255, 1
    %v257 = vadd.f32 %v255, %v256
    %v258 = vsel %vm208, %v207, 0.0
    %v259 = vrot.slane %v258, 4
    %v260 = vadd.f32 %v258, %v259
    %v261 = vrot.slane %v260, 2
    %v262 = vadd.f32 %v260, %v261
    %v263 = vrot.slane %v262, 1
    %v264 = vadd.f32 %v262, %v263
    %vm265 = vcmp.ge.s32.totalorder %v42, 0
    %vm266 = vcmp.le.s32.totalorder %v42, 51
    %vm267 = vmand %vm265, %vm266
    %v268 = vsel %vm267, 1, 0
    %v269 = vcvt.s32.f32 %v268
    %vm270 = vcmask 39936
    %v271 = vsel %vm270, %v269, inf
    %272 = vmin.xlane.f32.xlu0 %v271
    %v273 = vpop.xlane.xlu0 %272
    %v274 = vmul.f32 %v273, 0.2
    %v276 = vrot.slane %v274, 1
    %v277 = vrot.slane %v274, 2
    %v278 = vrot.slane %v274, 3
    %v279 = vrot.slane %v274, 4
    %v280 = vrot.slane %v274, 5
    %v281 = vrot.slane %v274, 6
    %v282 = vrot.slane %v274, 7
    %v291 = vmul.f32 %v215, %v274
    %v292 = vmul.f32 %v222, %v276
    %v293 = vmul.f32 %v229, %v277
    %v294 = vmul.f32 %v236, %v278
    %v295 = vmul.f32 %v243, %v279
    %v296 = vmul.f32 %v250, %v280
    %v297 = vmul.f32 %v257, %v281
    %v298 = vmul.f32 %v264, %v282
    %v299 = vld [vmem:[#allocation5] sm:$0xff]
    %v300 = vld [vmem:[#allocation5 + $0x8] sm:$0xff]
    %v301 = vld [vmem:[#allocation5 + $0x10] sm:$0xff]
    %v310 = vrot.slane %v292, 7
    %vm311 = vcmask 1041409
    %v312 = vsel %vm311, %v310, %v291
    %v313 = vrot.slane %v293, 6
    %vm314 = vcmask 1042434
    %v315 = vsel %vm314, %v313, %v312
    %v316 = vrot.slane %v294, 5
    %vm317 = vcmask 1043459
    %v318 = vsel %vm317, %v316, %v315
    %v319 = vrot.slane %v295, 4
    %vm320 = vcmask 1044484
    %v321 = vsel %vm320, %v319, %v318
    %v322 = vrot.slane %v296, 3
    %vm323 = vcmask 1045509
    %v324 = vsel %vm323, %v322, %v321
    %v325 = vrot.slane %v297, 2
    %vm326 = vcmask 1046534
    %v327 = vsel %vm326, %v325, %v324
    %v328 = vrot.slane %v298, 1
    %vm329 = vcmask 1047559
    %v330 = vsel %vm329, %v328, %v327
    %vm331 = vcmask 195584
    %v332 = vsel %vm331, %v330, 0
    %334 = vmatpush.msra.mxu0 0.0
    %335 = vmatpush.msra.mxu0 0.0
    %336 = vmatpush.msra.mxu0 0.0
    %337 = vmatpush.msra.mxu0 0.0
    %338 = vmatpush.msra.mxu0 0.0
    %339 = vmatpush.msra.mxu0 0.0
    %340 = vmatpush.msra.mxu0 0.0
    %341 = vmatpush.msra.mxu0 0.0
    %342 = vmatpush.msra.mxu0 0.0
    %343 = vmatpush.msra.mxu0 0.0
    %344 = vmatpush.msra.mxu0 0.0
    %345 = vmatpush.msra.mxu0 0.0
    %346 = vmatpush.msra.mxu0 0.0
    %347 = vmatpush.msra.mxu0 %v301
    %348 = vmatpush.msra.mxu0 %v300
    %349 = vmatpush.msra.mxu0 %v299
    %350 = vmatmul.f32.gmra.mxu0 %v332
    %v351 = vpop.f32.mrf.mxu0
    %v352 = vadd.f32 0.0, %v351
    %353 = vdwg.mxu0
    %354 = vst [vmem:[#allocation7] sm:$0xff] %v352
    // Predicated region
    $region18: #{tpu_custom_call.1} parent=1 // pred_check
      _
    $region19: #{tpu_custom_call.1} parent=1 // pred_check_branch
      %356 = sbr.rel (0) target = $region21
    $region20: #{tpu_custom_call.1} parent=1 // pred_region
      %358 = vsyncadd [#allocation4], 0
      %s360 = sshll.u32 [#allocation7], 4
      %s361 = int_to_ptr.vmem [resolvable:$true] %s360
      %s362 = sshll.u32 %s2, 4
      %s363 = int_to_ptr.hbm [resolvable:$true] %s362
      %365 = dma.vmem_to_hbm [thread:$0]  %s361, 128, %s363, [#allocation4]
    $region21: #{tpu_custom_call.1} parent=1 // pred_fallthru
      _
    // Predicated region
    $region22: #{tpu_custom_call.1} parent=1 // pred_check
      _
    $region23: #{tpu_custom_call.1} parent=1 // pred_check_branch
      %367 = sbr.rel (0) target = $region25
    $region24: #{tpu_custom_call.1} parent=1 // pred_region
      %369 = dma.done [#allocation4], 128
    $region25: #{tpu_custom_call.1} parent=1 // pred_fallthru
      _
    %370 = vsyncpa [#allocation3], 1
    %371 = vsyncpa [#allocation6], 1
    %372 = vsyncpa [#allocation4], 1

</llo_original>
